<compile_context>
chip_gen: v7x
topology: tpu7x:2x2x1
jax: 0.10.0
libtpu: 0.0.40
codegen_flags: <defaults>
</compile_context>

<pallas_src>
import jax
import jax.numpy as jnp
from jax.experimental import pallas as pl
from jax.experimental.pallas import tpu as pltpu


# ------------------------------- kernel --------------------------------------

def hswish_kernel(x_ref, o_ref):
    # Elementwise VPU work on one tile: x * clamp(x + 3, 0, 6) * (1/6).
    x = x_ref[...].astype(jnp.float32)
    gate = jnp.minimum(jnp.maximum(x + 3.0, 0.0), 6.0) * (1.0 / 6.0)
    o_ref[...] = (x * gate).astype(o_ref.dtype)


# ------------------------------- wrapper --------------------------------------

def _round_up(a, b):
    return ((a + b - 1) // b) * b


def h_swish_forward(x, *, block_bytes=6 << 20, vmem_limit_bytes=32 << 20,
                    donate_x=False):
    """Apply h_swish elementwise via a single Pallas TPU kernel.

    No padding or slicing passes: only free (contiguous) reshapes around the
    pallas_call, so HBM traffic stays at the 2N-byte roofline for any shape.
    """
    dtype = x.dtype
    if not jnp.issubdtype(dtype, jnp.floating):
        raise TypeError(f"h_swish expects a floating dtype, got {dtype}")

    orig_shape = x.shape
    n = x.size
    if n == 0:
        return x

    itemsize = jnp.dtype(dtype).itemsize
    packing = max(1, 4 // itemsize)      # 1 for f32, 2 for bf16/f16, 4 for 8-bit
    sublanes = 8 * packing               # minimum sublane tile for this dtype
    lanes = 128

    flat = x.reshape(-1)                 # free: contiguous bitcast

    compiler_params = pltpu.CompilerParams(
        dimension_semantics=("parallel",),       # lets v7x split across both TCs
        vmem_limit_bytes=vmem_limit_bytes,
    )
    io_aliases = {0: 0} if donate_x else {}
    cost = pl.CostEstimate(
        flops=5 * n, transcendentals=0, bytes_accessed=2 * n * itemsize)

    if n % lanes == 0:
        # ---- lane-dense 2-D slab; ragged row blocks handled by Pallas ----
        rows = n // lanes
        tgt_rows = max(
            sublanes,
            (block_bytes // (lanes * itemsize)) // sublanes * sublanes)
        block_rows = tgt_rows if rows > tgt_rows else _round_up(rows, sublanes)
        grid = (pl.cdiv(rows, block_rows),)
        spec = pl.BlockSpec((block_rows, lanes), lambda i: (i, 0))

        x2 = flat.reshape(rows, lanes)   # free: contiguous bitcast
        out = pl.pallas_call(
            hswish_kernel,
            out_shape=jax.ShapeDtypeStruct((rows, lanes), dtype),
            grid_spec=pltpu.PrefetchScalarGridSpec(
                num_scalar_prefetch=0, grid=grid,
                in_specs=[spec], out_specs=spec),
            compiler_params=compiler_params,
            input_output_aliases=io_aliases,
            cost_estimate=cost,
        )(x2)
        return out.reshape(orig_shape)   # free
    else:
        # ---- ragged element count: flat 1-D blocks, masked final block ----
        granule = sublanes * lanes       # full-vreg-aligned element granule
        max_block_elems = max(
            granule, (block_bytes // itemsize) // granule * granule)
        if n <= max_block_elems:
            block_elems = n              # full-array block (exempt from tiling)
        else:
            block_elems = max_block_elems
        grid = (pl.cdiv(n, block_elems),)
        spec = pl.BlockSpec((block_elems,), lambda i: (i,))

        out = pl.pallas_call(
            hswish_kernel,
            out_shape=jax.ShapeDtypeStruct((n,), dtype),
            grid_spec=pltpu.PrefetchScalarGridSpec(
                num_scalar_prefetch=0, grid=grid,
                in_specs=[spec], out_specs=spec),
            compiler_params=compiler_params,
            input_output_aliases=io_aliases,
            cost_estimate=cost,
        )(flat)
        return out.reshape(orig_shape)   # free


# --------------------------- pure-JAX reference --------------------------------

def h_swish_reference(x):
    return x * (jnp.clip(x + 3.0, 0.0, 6.0) / 6.0)


# --------------------------------- main ----------------------------------------

if __name__ == "__main__":
    key = jax.random.PRNGKey(0)
    k1, k2, k3 = jax.random.split(key, 3)

    # (B, C, H, W) activation, values spread past the [-3, 3] knees.
    x = 6.0 * jax.random.normal(k1, (2, 4, 16, 16), jnp.float32)
    out = jax.block_until_ready(h_swish_forward(x))
    ref = h_swish_reference(x)
    assert out.shape == x.shape and out.dtype == x.dtype
    assert jnp.allclose(out, ref, atol=1e-4, rtol=1e-5), (
        f"f32 mismatch: max abs err = {jnp.max(jnp.abs(out - ref))}")

    # Ragged element count (not a multiple of 128) -> flat 1-D masked path,
    # no pad / slice HBM passes.
    x2 = 6.0 * jax.random.normal(k2, (3, 7, 37, 53), jnp.float32)
    out2 = jax.block_until_ready(h_swish_forward(x2))
    ref2 = h_swish_reference(x2)
    assert out2.shape == x2.shape
    assert jnp.allclose(out2, ref2, atol=1e-4, rtol=1e-5), (
        f"ragged mismatch: max abs err = {jnp.max(jnp.abs(out2 - ref2))}")

    # bf16 activations: dtype-aware sublane tiling (16-row granule),
    # math in f32, stored back as bf16.
    x3 = (6.0 * jax.random.normal(k3, (2, 8, 16, 16), jnp.float32)
          ).astype(jnp.bfloat16)
    out3 = jax.block_until_ready(h_swish_forward(x3))
    ref3 = h_swish_reference(x3.astype(jnp.float32)).astype(jnp.bfloat16)
    assert out3.dtype == jnp.bfloat16 and out3.shape == x3.shape
    assert jnp.allclose(out3.astype(jnp.float32), ref3.astype(jnp.float32),
                        atol=2e-2, rtol=2e-2)

    print("KERNEL_OK")
</pallas_src>

<mosaic_0001>
module attributes {stable_mosaic.version = 11 : i64} {
  func.func @hswish_kernel(%arg0: i32, %arg1: memref<16x128xf32, #tpu.memory_space<vmem>>, %arg2: memref<16x128xf32, #tpu.memory_space<vmem>>) attributes {dimension_semantics = [#tpu.dimension_semantics<parallel>], iteration_bounds = array<i64: 1>, scalar_prefetch = 0 : i64, scratch_operands = 0 : i64, tpu.core_type = #tpu.core_type<tc>, window_params = [{transform_indices = @transform_0, window_bounds = array<i64: 16, 128>}, {transform_indices = @transform_1, window_bounds = array<i64: 16, 128>}]} {
    %c0 = arith.constant 0 : index
    %c0_0 = arith.constant 0 : index
    %0 = vector.load %arg1[%c0, %c0_0] : memref<16x128xf32, #tpu.memory_space<vmem>>, vector<16x128xf32>
    %cst = arith.constant 3.000000e+00 : f32
    %1 = vector.broadcast %cst : f32 to vector<16x128xf32>
    %2 = arith.addf %0, %1 : vector<16x128xf32>
    %cst_1 = arith.constant 0.000000e+00 : f32
    %3 = vector.broadcast %cst_1 : f32 to vector<16x128xf32>
    %4 = arith.maximumf %2, %3 : vector<16x128xf32>
    %cst_2 = arith.constant 6.000000e+00 : f32
    %5 = vector.broadcast %cst_2 : f32 to vector<16x128xf32>
    %6 = arith.minimumf %4, %5 : vector<16x128xf32>
    %cst_3 = arith.constant 0.166666672 : f32
    %7 = vector.broadcast %cst_3 : f32 to vector<16x128xf32>
    %8 = arith.mulf %6, %7 : vector<16x128xf32>
    %9 = arith.mulf %0, %8 : vector<16x128xf32>
    %c0_4 = arith.constant 0 : index
    %c0_5 = arith.constant 0 : index
    %10 = vector.load %arg2[%c0_4, %c0_5] : memref<16x128xf32, #tpu.memory_space<vmem>>, vector<16x128xf32>
    tpu.vector_store %arg2[%c0_4, %c0_5], %9 {strides = array<i32>} : memref<16x128xf32, #tpu.memory_space<vmem>>, vector<16x128xf32>,
    return
  }
  func.func @transform_0(%arg0: i32) -> (i32, i32) {
    %c0_i32 = arith.constant 0 : i32
    %c0_i32_0 = arith.constant 0 : i32
    return %arg0, %c0_i32 : i32, i32
  }
  func.func @transform_1(%arg0: i32) -> (i32, i32) {
    %c0_i32 = arith.constant 0 : i32
    %c0_i32_0 = arith.constant 0 : i32
    return %arg0, %c0_i32 : i32, i32
  }
}

</mosaic_0001>

<llo_original>
// kernel: tpu_custom_call.1
$region0: #{tpu_custom_call.1}
  #allocation0 [shape = 'u32[]', space=smem, size = 0x4, offset = 0x4, fixed_abs, tag = 'smem constant byte address 0x4 - core index']
  #allocation1 [shape = 'u32[144,128]{1,0:T(1,128)}', space=vmem, size = 0x12000, scoped, tag = 'internal scratch']
  %s0 = inlined_call_operand.hbm [shape: f32[16,128], index: 0, kind: input, shape index: {}]
  %s1 = inlined_call_operand.hbm [shape: f32[16,128], index: 1, kind: output, shape index: {}]
  %s2 = sld [smem:[#allocation0]]
  $region18: #{tpu_custom_call.1} parent=0
    _
  %s4 = ssub.s32 1, %s2
  %s5 = scalar_select 0, %s4, %s2
  $region1: #{tpu_custom_call.1} parent=0
    #allocation2 [shape = 'u8[8192]{0}', space=vmem, size = 0x2000, scoped, tag = 'input window, operand 0, single buffered']
    #allocation3 [shape = 's32[1]{0}', space=sflag, size = 0x4, scoped, tag = 'scoped memory for tpu_custom_call.1']
    #allocation4 [shape = 's32[1]{0}', space=sflag, size = 0x4, scoped, tag = 'scoped memory for tpu_custom_call.1']
    #allocation5 [shape = 'u8[8192]{0}', space=vmem, size = 0x2000, scoped, tag = 'output window, operand 0, single buffered']
    %6 = vsyncpa [#allocation3], 0
    %7 = vsyncpa [#allocation4], 0
    // Predicated region
    $region2: #{tpu_custom_call.1} parent=1 // pred_check
      _
    $region3: #{tpu_custom_call.1} parent=1 // pred_check_branch
      %9 = sbr.rel (0) target = $region5
    $region4: #{tpu_custom_call.1} parent=1 // pred_region
      %s11 = ssub.s32 256, 256
      %12 = vsyncadd [#allocation3], %s11
      %s13 = sshll.u32 [#allocation2], 4
      %s14 = int_to_ptr.vmem [resolvable:$true] %s13
      %19 = dma.hbm_to_vmem [thread:$0]  %s0, 256, %s14, [#allocation3], 128, 128, 8
    $region5: #{tpu_custom_call.1} parent=1 // pred_fallthru
      _
    // Predicated region
    $region6: #{tpu_custom_call.1} parent=1 // pred_check
      _
    $region7: #{tpu_custom_call.1} parent=1 // pred_check_branch
      %21 = sbr.rel (0) target = $region9
    $region8: #{tpu_custom_call.1} parent=1 // pred_region
      %22 = dma.done [#allocation3], 256
    $region9: #{tpu_custom_call.1} parent=1 // pred_fallthru
      _
    %v23 = vld [vmem:[#allocation2] sm:$0xff]
    %v24 = vld [vmem:[#allocation2 + $0x8] sm:$0xff]
    %v25 = vadd.f32 %v23, 3.0
    %v26 = vadd.f32 %v24, 3.0
    %v27 = vmax.f32 %v25, 0.0
    %v28 = vmax.f32 %v26, 0.0
    %v29 = vmin.f32 %v27, 6.0
    %v30 = vmin.f32 %v28, 6.0
    %v31 = vmul.f32 %v29, 0.16666667
    %v32 = vmul.f32 %v30, 0.16666667
    %v33 = vmul.f32 %v23, %v31
    %v34 = vmul.f32 %v24, %v32
    %35 = vst [vmem:[#allocation5] sm:$0xff] %v33
    %36 = vst [vmem:[#allocation5 + $0x8] sm:$0xff] %v34
    // Predicated region
    $region10: #{tpu_custom_call.1} parent=1 // pred_check
      _
    $region11: #{tpu_custom_call.1} parent=1 // pred_check_branch
      %38 = sbr.rel (0) target = $region13
    $region12: #{tpu_custom_call.1} parent=1 // pred_region
      %s40 = ssub.s32 256, 256
      %41 = vsyncadd [#allocation4], %s40
      %s42 = sshll.u32 [#allocation5], 4
      %s43 = int_to_ptr.vmem [resolvable:$true] %s42
      %48 = dma.vmem_to_hbm [thread:$0]  %s43, 256, %s1, [#allocation4], 128, 128, 8
    $region13: #{tpu_custom_call.1} parent=1 // pred_fallthru
      _
    // Predicated region
    $region14: #{tpu_custom_call.1} parent=1 // pred_check
      _
    $region15: #{tpu_custom_call.1} parent=1 // pred_check_branch
      %50 = sbr.rel (0) target = $region17
    $region16: #{tpu_custom_call.1} parent=1 // pred_region
      %51 = dma.done [#allocation4], 256
    $region17: #{tpu_custom_call.1} parent=1 // pred_fallthru
      _
    %52 = vsyncpa [#allocation3], 1
    %53 = vsyncpa [#allocation4], 1

</llo_original>
